<compile_context>
chip_gen: v5e
topology: v5e:2x2
jax: 0.10.0
libtpu: 0.0.40
codegen_flags: <defaults>
</compile_context>

<pallas_src>
import jax
import jax.numpy as jnp
from jax.experimental import pallas as pl
from jax.experimental.pallas import tpu as pltpu


def _copy_kernel(x_ref, o_ref):
    # Pure full-tile copy; the chomp is expressed entirely in the grid /
    # BlockSpecs (output is simply narrower than the input along L).
    o_ref[...] = x_ref[...]


def _round_down(v, m):
    return (v // m) * m


def _round_up(v, m):
    return ((v + m - 1) // m) * m


def chomp1d(x: jax.Array, chomp_size: int, *,
            target_block_bytes: int = 2 << 20) -> jax.Array:
    """Pallas equivalent of Chomp1d.forward: x[:, :, :-chomp_size]."""
    assert x.ndim == 3, "expected (N, C, L)"
    N, C, L = x.shape
    assert 0 < chomp_size < L, "chomp_size must be in (0, L)"
    L_out = L - chomp_size

    if L_out < 128:
        # Sub-lane-width output => masked partial stores in Pallas; XLA copies
        # shapes this small at roofline, so don't launch a kernel.
        return x[:, :, :L_out]

    itemsize = jnp.dtype(x.dtype).itemsize
    sublane = max(8, 32 // itemsize)  # 8 for f32, 16 for bf16, 32 for int8

    # Flatten batch x channels into one row axis (free reshape on the wrapper
    # side; removes sublane padding for small C and collapses two grid axes).
    R = N * C
    x2 = x.reshape(R, L)

    # ---- lane tile: balanced multiples of 128, byte-capped per row --------
    tl_max = max(128, _round_down(4096 // itemsize, 128))  # ~4 KiB of lanes/row
    n_l = pl.cdiv(L_out, tl_max)
    tl = min(tl_max, _round_up(pl.cdiv(L_out, n_l), 128))

    # ---- row tile: fill the byte budget ------------------------------------
    row_budget = max(1, target_block_bytes // (tl * itemsize))
    if R <= sublane:
        tr = R  # full dim is always a legal block extent
    else:
        tr = max(sublane, min(_round_down(row_budget, sublane),
                              _round_down(R, sublane)))

    grid_r = pl.cdiv(R, tr)
    grid_l = pl.cdiv(L_out, tl)
    block = (tr, tl)

    # Lead with the axis that has the most blocks so the v7x megacore shards
    # the big axis across both TensorCores (no-op on v5e/v6e).
    if grid_r >= grid_l:
        grid = (grid_r, grid_l)
        index_map = lambda r, l: (r, l)
    else:
        grid = (grid_l, grid_r)
        index_map = lambda l, r: (r, l)

    # 2x double-buffered input + 2x output blocks + headroom; stays within the
    # scoped VMEM on v5e (16 MiB default raised as needed), v6e and v7x.
    block_bytes = tr * tl * itemsize
    vmem_limit = int(min(32 << 20, max(16 << 20, 4 * block_bytes + (4 << 20))))

    out2 = pl.pallas_call(
        _copy_kernel,
        out_shape=jax.ShapeDtypeStruct((R, L_out), x.dtype),
        grid=grid,
        in_specs=[pl.BlockSpec(block, index_map)],
        out_specs=pl.BlockSpec(block, index_map),
        compiler_params=pltpu.CompilerParams(
            dimension_semantics=("parallel", "parallel"),
            vmem_limit_bytes=vmem_limit,
        ),
    )(x2)

    return out2.reshape(N, C, L_out)


if __name__ == "__main__":
    key = jax.random.PRNGKey(0)
    k1, k2, k3 = jax.random.split(key, 3)

    # 1) Small, spec-consistent shape (N=2, C=4, L=16) -> XLA small-L fallback.
    chomp_small = 3
    x_small = jax.random.normal(k1, (2, 4, 16), dtype=jnp.float32)
    out_small = jax.block_until_ready(chomp1d(x_small, chomp_small))
    ref_small = x_small[:, :, :-chomp_small]
    assert out_small.shape == ref_small.shape, out_small.shape
    assert jnp.array_equal(out_small, ref_small), "mismatch (small path)"

    # 2) Moderate f32 shape -> Pallas tiled path with a balanced ragged edge
    #    block along L and the flattened (N*C) row axis.
    chomp_big = 5
    x_big = jax.random.normal(k2, (2, 32, 1408), dtype=jnp.float32)
    out_big = jax.block_until_ready(chomp1d(x_big, chomp_big))
    ref_big = x_big[:, :, :-chomp_big]
    assert out_big.shape == ref_big.shape, out_big.shape
    assert jnp.array_equal(out_big, ref_big), "mismatch (tiled f32 path)"

    # 3) bf16 -> exercises dtype-scaled (byte-sized) tiles.
    chomp_bf = 7
    x_bf = jax.random.normal(k3, (1, 8, 2000), dtype=jnp.bfloat16)
    out_bf = jax.block_until_ready(chomp1d(x_bf, chomp_bf))
    ref_bf = x_bf[:, :, :-chomp_bf]
    assert out_bf.shape == ref_bf.shape, out_bf.shape
    assert jnp.array_equal(out_bf, ref_bf), "mismatch (tiled bf16 path)"

    print("KERNEL_OK")
</pallas_src>

<mosaic_0001>
module attributes {stable_mosaic.version = 11 : i64} {
  func.func @_copy_kernel(%arg0: i32, %arg1: i32, %arg2: memref<64x768xf32, #tpu.memory_space<vmem>>, %arg3: memref<64x768xf32, #tpu.memory_space<vmem>>) attributes {dimension_semantics = [#tpu.dimension_semantics<parallel>, #tpu.dimension_semantics<parallel>], iteration_bounds = array<i64: 2, 1>, scalar_prefetch = 0 : i64, scratch_operands = 0 : i64, tpu.core_type = #tpu.core_type<tc>, window_params = [{transform_indices = @transform_0, window_bounds = array<i64: 64, 768>}, {transform_indices = @transform_1, window_bounds = array<i64: 64, 768>}]} {
    %c0 = arith.constant 0 : index
    %c0_0 = arith.constant 0 : index
    %0 = vector.load %arg2[%c0, %c0_0] : memref<64x768xf32, #tpu.memory_space<vmem>>, vector<64x768xf32>
    %c0_1 = arith.constant 0 : index
    %c0_2 = arith.constant 0 : index
    %1 = vector.load %arg3[%c0_1, %c0_2] : memref<64x768xf32, #tpu.memory_space<vmem>>, vector<64x768xf32>
    tpu.vector_store %arg3[%c0_1, %c0_2], %0 {strides = array<i32>} : memref<64x768xf32, #tpu.memory_space<vmem>>, vector<64x768xf32>,
    return
  }
  func.func @transform_0(%arg0: i32, %arg1: i32) -> (i32, i32) {
    %c0_i32 = arith.constant 0 : i32
    return %arg1, %arg0 : i32, i32
  }
  func.func @transform_1(%arg0: i32, %arg1: i32) -> (i32, i32) {
    %c0_i32 = arith.constant 0 : i32
    return %arg1, %arg0 : i32, i32
  }
}

</mosaic_0001>

<llo_original>
// kernel: tpu_custom_call.1
$region0: #{tpu_custom_call.1}
  #allocation0 [shape = 'u32[]', space=smem, size = 0x4, offset = 0x4, fixed_abs, tag = 'smem constant byte address 0x4 - core index']
  #allocation1 [shape = 'u32[72,128]{1,0:T(1,128)}', space=vmem, size = 0x9000, scoped, tag = 'internal scratch']
  %s0 = inlined_call_operand.hbm [shape: f32[64,1408], index: 0, kind: input, shape index: {}]
  %s1 = inlined_call_operand.hbm [shape: f32[64,1403], index: 1, kind: output, shape index: {}]
  %s2 = sld [smem:[#allocation0]]
  $region41: #{tpu_custom_call.1} parent=0
    _
  %s4 = ssub.s32 1, %s2
  %s5 = scalar_select 0, %s4, %s2
  $region1: #{tpu_custom_call.1} parent=0
    #allocation2 [shape = 'u8[393216]{0}', space=vmem, size = 0x60000, scoped, tag = 'input window, operand 0']
    #allocation3 [shape = 's32[2]{0}', space=sflag, size = 0x8, scoped, tag = 'scoped memory for tpu_custom_call.1']
    #allocation4 [shape = 's32[2]{0}', space=sflag, size = 0x8, scoped, tag = 'scoped memory for tpu_custom_call.1']
    #allocation5 [shape = 'u8[393216]{0}', space=vmem, size = 0x60000, scoped, tag = 'output window, operand 0']
    %6 = vsyncpa [#allocation3], 0
    %s7 = scalar_lea.sflag [#allocation3], 1
    %8 = vsyncpa %s7, 0
    %9 = vsyncpa [#allocation4], 0
    %s10 = scalar_lea.sflag [#allocation4], 1
    %11 = vsyncpa %s10, 0
    loop: start=0, step=1, limit=4
    $region2: #{tpu_custom_call.1} parent=1 // loop_pre_header
      _
    $region3: #{tpu_custom_call.1} parent=1 // loop_header
      %s13 = sphi 0, %s17
      %p14 = scmp.ge.s32.totalorder %s13, 4
      %s20 = sphi 0, %s32
      %s21 = sphi 0, %s28
      %s22 = sphi 0, %s20
      %s23 = sphi 0, %s21
      %s24 = sphi 0, %s22
      %s25 = sphi 0, %s23
      %s37 = sphi 0, %s39
      %s40 = sphi 0, %s37
      %s41 = sphi 0, %s40
      %s57 = sphi 0, %s41
      %s65 = sphi 0, %s67
      %s68 = sphi 0, %s65
      %s69 = sphi 0, %s68
      %s85 = sphi 0, %s69
    $region4: #{tpu_custom_call.1} parent=1 // loop_header_branch
      %16 = sbr.rel (%p14) target = $region8
    $region5: #{tpu_custom_call.1} parent=1 // loop_body
      %s18 = ssub.s32 %s13, 1
      %s19 = ssub.s32 %s13, 2
      %s26 = sadd.s32 1, %s21
      %p27 = scmp.ge.s32.totalorder %s26, 1
      %s28 = scalar_select %p27, 0, %s26
      %s29 = sadd.s32 1, %s20
      %s30 = scalar_select %p27, %s29, %s20
      %p31 = scmp.ge.s32.totalorder %s30, 2
      %s32 = scalar_select %p31, 0, %s30
      %s33 = ssub.s32 %s21, %s28
      %s34 = ssub.s32 %s20, %s32
      %s35 = sor.u32 %s33, %s34
      %p36 = scmp.eq.s32.totalorder %s35, 0
      %s38 = sadd.s32 %s37, 1
      %s39 = scalar_select %p36, %s37, %s38
      %p42 = pneg %p36
      %p43 = scmp.eq.s32.totalorder %s13, 1
      %p44 = por %p42, %p43
      %p45 = scmp.ne.s32.totalorder %s37, %s40
      %p46 = scmp.eq.s32.totalorder %s13, 0
      %p47 = por %p45, %p46
      %p48 = scmp.ne.s32.totalorder %s37, %s40
      %p49 = scmp.eq.s32.totalorder %s18, 1
      %p50 = por %p48, %p49
      %p51 = scmp.ne.s32.totalorder %s40, %s41
      %p52 = scmp.eq.s32.totalorder %s18, 0
      %p53 = por %p51, %p52
      %p54 = scmp.ne.s32.totalorder %s40, %s41
      %p55 = scmp.eq.s32.totalorder %s19, 1
      %p56 = por %p54, %p55
      %p58 = scmp.ne.s32.totalorder %s41, %s57
      %p59 = scmp.eq.s32.totalorder %s19, 0
      %p60 = por %p58, %p59
      %s61 = ssub.s32 %s21, %s28
      %s62 = ssub.s32 %s20, %s32
      %s63 = sor.u32 %s61, %s62
      %p64 = scmp.eq.s32.totalorder %s63, 0
      %s66 = sadd.s32 %s65, 1
      %s67 = scalar_select %p64, %s65, %s66
      %p70 = pneg %p64
      %p71 = scmp.eq.s32.totalorder %s13, 1
      %p72 = por %p70, %p71
      %p73 = scmp.ne.s32.totalorder %s65, %s68
      %p74 = scmp.eq.s32.totalorder %s13, 0
      %p75 = por %p73, %p74
      %p76 = scmp.ne.s32.totalorder %s65, %s68
      %p77 = scmp.eq.s32.totalorder %s18, 1
      %p78 = por %p76, %p77
      %p79 = scmp.ne.s32.totalorder %s68, %s69
      %p80 = scmp.eq.s32.totalorder %s18, 0
      %p81 = por %p79, %p80
      %p82 = scmp.ne.s32.totalorder %s68, %s69
      %p83 = scmp.eq.s32.totalorder %s19, 1
      %p84 = por %p82, %p83
      %p86 = scmp.ne.s32.totalorder %s69, %s85
      %p87 = scmp.eq.s32.totalorder %s19, 0
      %p88 = por %p86, %p87
      %p89 = scmp.le.s32.totalorder 1, %s13
      %p90 = scmp.lt.s32.totalorder %s13, 3
      %p91 = pnand %p89, %p90
      %p92 = pneg %p91
      // Predicated region
      $region9: #{tpu_custom_call.1} parent=5 // pred_check
        _
      $region10: #{tpu_custom_call.1} parent=5 // pred_check_branch
        %94 = sbr.rel (%p91) target = $region12
      $region11: #{tpu_custom_call.1} parent=5 // pred_region
        %s95 = ssub.s32 %s13, 1
      $region12: #{tpu_custom_call.1} parent=5 // pred_fallthru
        _
      %p96 = scmp.lt.s32.totalorder %s13, 2
      // Predicated region
      $region13: #{tpu_custom_call.1} parent=5 // pred_check
        %p97 = pneg %p96
      $region14: #{tpu_custom_call.1} parent=5 // pred_check_branch
        %99 = sbr.rel (%p97) target = $region16
      $region15: #{tpu_custom_call.1} parent=5 // pred_region
        // Predicated region
        $region17: #{tpu_custom_call.1} parent=15 // pred_check
          %p100 = pneg %p47
        $region18: #{tpu_custom_call.1} parent=15 // pred_check_branch
          %102 = sbr.rel (%p100) target = $region20
        $region19: #{tpu_custom_call.1} parent=15 // pred_region
          %s103 = sand.u32 %s37, 1
          %s104 = scalar_lea.sflag [#allocation3], %s103
          %s105 = sand.u32 %s37, 1
          %s106 = smul.addr %s105, 384
          %s107 = scalar_lea.vmem [#allocation2], %s106
          %s108 = smul.u32 8, %s21
          %s109 = smul.u32 6, %s20
          %s110 = ssub.s32 11, %s109
          %p111 = scmp.lt.s32.totalorder %s110, 6
          %s112 = scalar_select %p111, %s110, 6
          %s113 = smul.u32 64, %s112
          %s114 = ssub.s32 384, %s113
          %s115 = sshll.u32 %s114, 4
          %116 = vsyncadd %s104, %s115
          %p117 = scmp.ne.s32.totalorder 0, %s113
          %s118 = smul.addr %s108, 11
          %s119 = sadd.s32 %s109, %s118
          %s120 = smul.addr %s119, 8
          %s121 = scalar_lea.hbm %s0, %s120
          %s122 = smul.u32 %s112, 8
          %s123 = smul.u32 %s122, 8
          %s124 = sshll.u32 %s121, 4
          %s125 = int_to_ptr.hbm [resolvable:$true] %s124
          %s126 = sshll.u32 %s107, 4
          %s127 = int_to_ptr.vmem [resolvable:$true] %s126
          %s128 = sshll.u32 %s123, 4
          %132 = dma.hbm_to_vmem [thread:$0]  (%p117), %s125, %s128, %s127, %s104, 1408, 768, %s122
        $region20: #{tpu_custom_call.1} parent=15 // pred_fallthru
          _
      $region16: #{tpu_custom_call.1} parent=5 // pred_fallthru
        _
      %p133 = scmp.le.s32.totalorder 1, %s13
      %p134 = scmp.lt.s32.totalorder %s13, 3
      %p135 = pnand %p133, %p134
      %p136 = pneg %p135
      // Predicated region
      $region21: #{tpu_custom_call.1} parent=5 // pred_check
        _
      $region22: #{tpu_custom_call.1} parent=5 // pred_check_branch
        %138 = sbr.rel (%p135) target = $region24
      $region23: #{tpu_custom_call.1} parent=5 // pred_region
        %s139 = ssub.s32 %s13, 1
        %s140 = sand.u32 %s40, 1
        %s141 = scalar_lea.sflag [#allocation3], %s140
        %s142 = sand.u32 %s40, 1
        %s143 = smul.addr %s142, 384
        %s144 = scalar_lea.vmem [#allocation2], %s143
        // Predicated region
        $region25: #{tpu_custom_call.1} parent=23 // pred_check
          %p145 = pneg %p53
        $region26: #{tpu_custom_call.1} parent=23 // pred_check_branch
          %147 = sbr.rel (%p145) target = $region28
        $region27: #{tpu_custom_call.1} parent=23 // pred_region
          %149 = dma.done %s141, 6144
        $region28: #{tpu_custom_call.1} parent=23 // pred_fallthru
          _
        %s150 = sand.u32 %s40, 1
        %s151 = scalar_lea.sflag [#allocation3], %s150
        %s152 = sand.u32 %s40, 1
        %s153 = smul.addr %s152, 384
        %s154 = scalar_lea.vmem [#allocation2], %s153
        %p155 = pneg %p53
        %p156 = pneg %p50
        %p157 = pneg %p81
        %p158 = pneg %p78
        %s159 = sand.u32 %s68, 1
        %s160 = scalar_lea.sflag [#allocation4], %s159
        %s161 = sand.u32 %s68, 1
        %s162 = smul.addr %s161, 384
        %s163 = scalar_lea.vmem [#allocation5], %s162
        %s164 = smul.u32 8, %s23
        %s165 = smul.u32 6, %s22
        %s166 = ssub.s32 11, %s165
        %p167 = scmp.lt.s32.totalorder %s166, 6
        %s168 = scalar_select %p167, %s166, 6
        %s169 = smul.u32 64, %s168
        %s170 = smul.u32 8, %s23
        %s171 = smul.u32 6, %s22
        %s172 = ssub.s32 11, %s171
        %p173 = scmp.lt.s32.totalorder %s172, 6
        %s174 = scalar_select %p173, %s172, 6
        %s175 = smul.u32 64, %s174
        %v176 = vld [vmem:[%s144] sm:$0xff]
        %v177 = vld [vmem:[%s144 + $0x8] sm:$0xff]
        %v178 = vld [vmem:[%s144 + $0x10] sm:$0xff]
        %v179 = vld [vmem:[%s144 + $0x18] sm:$0xff]
        %v180 = vld [vmem:[%s144 + $0x20] sm:$0xff]
        %v181 = vld [vmem:[%s144 + $0x28] sm:$0xff]
        %v182 = vld [vmem:[%s144 + $0x30] sm:$0xff]
        %v183 = vld [vmem:[%s144 + $0x38] sm:$0xff]
        %v184 = vld [vmem:[%s144 + $0x40] sm:$0xff]
        %v185 = vld [vmem:[%s144 + $0x48] sm:$0xff]
        %v186 = vld [vmem:[%s144 + $0x50] sm:$0xff]
        %v187 = vld [vmem:[%s144 + $0x58] sm:$0xff]
        %v188 = vld [vmem:[%s144 + $0x60] sm:$0xff]
        %v189 = vld [vmem:[%s144 + $0x68] sm:$0xff]
        %v190 = vld [vmem:[%s144 + $0x70] sm:$0xff]
        %v191 = vld [vmem:[%s144 + $0x78] sm:$0xff]
        %v192 = vld [vmem:[%s144 + $0x80] sm:$0xff]
        %v193 = vld [vmem:[%s144 + $0x88] sm:$0xff]
        %v194 = vld [vmem:[%s144 + $0x90] sm:$0xff]
        %v195 = vld [vmem:[%s144 + $0x98] sm:$0xff]
        %v196 = vld [vmem:[%s144 + $0xa0] sm:$0xff]
        %v197 = vld [vmem:[%s144 + $0xa8] sm:$0xff]
        %v198 = vld [vmem:[%s144 + $0xb0] sm:$0xff]
        %v199 = vld [vmem:[%s144 + $0xb8] sm:$0xff]
        %v200 = vld [vmem:[%s144 + $0xc0] sm:$0xff]
        %v201 = vld [vmem:[%s144 + $0xc8] sm:$0xff]
        %v202 = vld [vmem:[%s144 + $0xd0] sm:$0xff]
        %v203 = vld [vmem:[%s144 + $0xd8] sm:$0xff]
        %v204 = vld [vmem:[%s144 + $0xe0] sm:$0xff]
        %v205 = vld [vmem:[%s144 + $0xe8] sm:$0xff]
        %v206 = vld [vmem:[%s144 + $0xf0] sm:$0xff]
        %v207 = vld [vmem:[%s144 + $0xf8] sm:$0xff]
        %v208 = vld [vmem:[%s144 + $0x100] sm:$0xff]
        %v209 = vld [vmem:[%s144 + $0x108] sm:$0xff]
        %v210 = vld [vmem:[%s144 + $0x110] sm:$0xff]
        %v211 = vld [vmem:[%s144 + $0x118] sm:$0xff]
        %v212 = vld [vmem:[%s144 + $0x120] sm:$0xff]
        %v213 = vld [vmem:[%s144 + $0x128] sm:$0xff]
        %v214 = vld [vmem:[%s144 + $0x130] sm:$0xff]
        %v215 = vld [vmem:[%s144 + $0x138] sm:$0xff]
        %v216 = vld [vmem:[%s144 + $0x140] sm:$0xff]
        %v217 = vld [vmem:[%s144 + $0x148] sm:$0xff]
        %v218 = vld [vmem:[%s144 + $0x150] sm:$0xff]
        %v219 = vld [vmem:[%s144 + $0x158] sm:$0xff]
        %v220 = vld [vmem:[%s144 + $0x160] sm:$0xff]
        %v221 = vld [vmem:[%s144 + $0x168] sm:$0xff]
        %v222 = vld [vmem:[%s144 + $0x170] sm:$0xff]
        %v223 = vld [vmem:[%s144 + $0x178] sm:$0xff]
        %224 = vst [vmem:[%s163] sm:$0xff] %v176
        %225 = vst [vmem:[%s163 + $0x8] sm:$0xff] %v177
        %226 = vst [vmem:[%s163 + $0x10] sm:$0xff] %v178
        %227 = vst [vmem:[%s163 + $0x18] sm:$0xff] %v179
        %228 = vst [vmem:[%s163 + $0x20] sm:$0xff] %v180
        %229 = vst [vmem:[%s163 + $0x28] sm:$0xff] %v181
        %230 = vst [vmem:[%s163 + $0x30] sm:$0xff] %v182
        %231 = vst [vmem:[%s163 + $0x38] sm:$0xff] %v183
        %232 = vst [vmem:[%s163 + $0x40] sm:$0xff] %v184
        %233 = vst [vmem:[%s163 + $0x48] sm:$0xff] %v185
        %234 = vst [vmem:[%s163 + $0x50] sm:$0xff] %v186
        %235 = vst [vmem:[%s163 + $0x58] sm:$0xff] %v187
        %236 = vst [vmem:[%s163 + $0x60] sm:$0xff] %v188
        %237 = vst [vmem:[%s163 + $0x68] sm:$0xff] %v189
        %238 = vst [vmem:[%s163 + $0x70] sm:$0xff] %v190
        %239 = vst [vmem:[%s163 + $0x78] sm:$0xff] %v191
        %240 = vst [vmem:[%s163 + $0x80] sm:$0xff] %v192
        %241 = vst [vmem:[%s163 + $0x88] sm:$0xff] %v193
        %242 = vst [vmem:[%s163 + $0x90] sm:$0xff] %v194
        %243 = vst [vmem:[%s163 + $0x98] sm:$0xff] %v195
        %244 = vst [vmem:[%s163 + $0xa0] sm:$0xff] %v196
        %245 = vst [vmem:[%s163 + $0xa8] sm:$0xff] %v197
        %246 = vst [vmem:[%s163 + $0xb0] sm:$0xff] %v198
        %247 = vst [vmem:[%s163 + $0xb8] sm:$0xff] %v199
        %248 = vst [vmem:[%s163 + $0xc0] sm:$0xff] %v200
        %249 = vst [vmem:[%s163 + $0xc8] sm:$0xff] %v201
        %250 = vst [vmem:[%s163 + $0xd0] sm:$0xff] %v202
        %251 = vst [vmem:[%s163 + $0xd8] sm:$0xff] %v203
        %252 = vst [vmem:[%s163 + $0xe0] sm:$0xff] %v204
        %253 = vst [vmem:[%s163 + $0xe8] sm:$0xff] %v205
        %254 = vst [vmem:[%s163 + $0xf0] sm:$0xff] %v206
        %255 = vst [vmem:[%s163 + $0xf8] sm:$0xff] %v207
        %256 = vst [vmem:[%s163 + $0x100] sm:$0xff] %v208
        %257 = vst [vmem:[%s163 + $0x108] sm:$0xff] %v209
        %258 = vst [vmem:[%s163 + $0x110] sm:$0xff] %v210
        %259 = vst [vmem:[%s163 + $0x118] sm:$0xff] %v211
        %260 = vst [vmem:[%s163 + $0x120] sm:$0xff] %v212
        %261 = vst [vmem:[%s163 + $0x128] sm:$0xff] %v213
        %262 = vst [vmem:[%s163 + $0x130] sm:$0xff] %v214
        %263 = vst [vmem:[%s163 + $0x138] sm:$0xff] %v215
        %264 = vst [vmem:[%s163 + $0x140] sm:$0xff] %v216
        %265 = vst [vmem:[%s163 + $0x148] sm:$0xff] %v217
        %266 = vst [vmem:[%s163 + $0x150] sm:$0xff] %v218
        %267 = vst [vmem:[%s163 + $0x158] sm:$0xff] %v219
        %268 = vst [vmem:[%s163 + $0x160] sm:$0xff] %v220
        %269 = vst [vmem:[%s163 + $0x168] sm:$0xff] %v221
        %270 = vst [vmem:[%s163 + $0x170] sm:$0xff] %v222
        %271 = vst [vmem:[%s163 + $0x178] sm:$0xff] %v223
        %s272 = sand.u32 %s68, 1
        %s273 = scalar_lea.sflag [#allocation4], %s272
        %s274 = sand.u32 %s68, 1
        %s275 = smul.addr %s274, 384
        %s276 = scalar_lea.vmem [#allocation5], %s275
        // Predicated region
        $region29: #{tpu_custom_call.1} parent=23 // pred_check
          %p277 = pneg %p78
        $region30: #{tpu_custom_call.1} parent=23 // pred_check_branch
          %279 = sbr.rel (%p277) target = $region32
        $region31: #{tpu_custom_call.1} parent=23 // pred_region
          %s280 = smul.u32 8, %s23
          %s281 = smul.u32 6, %s22
          %s282 = ssub.s32 11, %s281
          %p283 = scmp.lt.s32.totalorder %s282, 6
          %s284 = scalar_select %p283, %s282, 6
          %s285 = smul.u32 64, %s284
          %s286 = ssub.s32 384, %s285
          %s287 = sshll.u32 %s286, 4
          %288 = vsyncadd %s273, %s287
          %p289 = scmp.ne.s32.totalorder 0, %s285
          %s290 = smul.addr %s280, 11
          %s291 = sadd.s32 %s281, %s290
          %s292 = smul.addr %s291, 8
          %s293 = scalar_lea.hbm %s1, %s292
          %s294 = smul.u32 %s284, 8
          %s295 = smul.u32 %s294, 8
          %s296 = sshll.u32 %s276, 4
          %s297 = int_to_ptr.vmem [resolvable:$true] %s296
          %s298 = sshll.u32 %s293, 4
          %s299 = int_to_ptr.hbm [resolvable:$true] %s298
          %s300 = sshll.u32 %s295, 4
          %304 = dma.vmem_to_hbm [thread:$0]  (%p289), %s297, %s300, %s299, %s273, 768, 1408, %s294
        $region32: #{tpu_custom_call.1} parent=23 // pred_fallthru
          _
      $region24: #{tpu_custom_call.1} parent=5 // pred_fallthru
        _
      %p305 = scmp.le.s32.totalorder 2, %s13
      // Predicated region
      $region33: #{tpu_custom_call.1} parent=5 // pred_check
        %p306 = pneg %p305
      $region34: #{tpu_custom_call.1} parent=5 // pred_check_branch
        %308 = sbr.rel (%p306) target = $region36
      $region35: #{tpu_custom_call.1} parent=5 // pred_region
        %s309 = ssub.s32 %s13, 2
        // Predicated region
        $region37: #{tpu_custom_call.1} parent=35 // pred_check
          %p310 = pneg %p84
        $region38: #{tpu_custom_call.1} parent=35 // pred_check_branch
          %312 = sbr.rel (%p310) target = $region40
        $region39: #{tpu_custom_call.1} parent=35 // pred_region
          %s313 = sand.u32 %s69, 1
          %s314 = scalar_lea.sflag [#allocation4], %s313
          %s315 = sand.u32 %s69, 1
          %s316 = smul.addr %s315, 384
          %s317 = scalar_lea.vmem [#allocation5], %s316
          %319 = dma.done %s314, 6144
        $region40: #{tpu_custom_call.1} parent=35 // pred_fallthru
          _
      $region36: #{tpu_custom_call.1} parent=5 // pred_fallthru
        _
    $region6: #{tpu_custom_call.1} parent=1 // loop_footer
      %s17 = sadd.s32 1, %s13
    $region7: #{tpu_custom_call.1} parent=1 // loop_footer_branch
      %12 = sbr.rel target = $region3
    $region8: #{tpu_custom_call.1} parent=1 // loop_exit
      _
    %320 = vsyncpa [#allocation3], 1
    %s321 = scalar_lea.sflag [#allocation3], 1
    %322 = vsyncpa %s321, 1
    %323 = vsyncpa [#allocation4], 1
    %s324 = scalar_lea.sflag [#allocation4], 1
    %325 = vsyncpa %s324, 1

</llo_original>
